<compile_context>
chip_gen: v5e
topology: v5e:2x2
jax: 0.10.0
libtpu: 0.0.40
codegen_flags: <defaults>
</compile_context>

<pallas_src>
import jax
import jax.numpy as jnp
from jax import lax
from jax.experimental import pallas as pl
from jax.experimental.pallas import tpu as pltpu

POINTS = 5        # self.points
DOWNSAMPLE = 4    # self.detector.downsample
WINDOW = 5        # self.config.window
STEPS = 3         # self.config.steps
TAU = 1.0
EPS = 1e-6

_LANES = 128      # lane-dense packing width


# ----------------------------------------------------------------------------
# Detector kernel: fused (avg-pool + 1x1 conv) as one frame-batched matmul
# ----------------------------------------------------------------------------
def _detector_kernel(x_ref, a_ref, bias_ref, o_ref):
    # rows = (frame, output-row) pairs, cols = (point, output-col) padded to a
    # multiple of 128 lanes, contraction = (pool-row, source-col, channel).
    o_ref[...] = (
        jnp.dot(x_ref[...], a_ref[...], preferred_element_type=jnp.float32)
        + bias_ref[...])


def _frames_per_step(bs, hd, k, npad, cap_bytes=2 << 20):
    """Largest divisor of `bs` whose 8-aligned row block fits a VMEM budget."""
    best = None
    for f in range(1, bs + 1):
        if bs % f:
            continue
        if (f * hd) % 8:
            continue
        if f * hd * (k + npad) * 4 > cap_bytes:
            continue
        best = f
    if best is None:
        best = bs   # fallback: whole batch in one step (block == full array)
    return best


def detector_forward(frames, w, b):
    """frames: (BS, C, H, W) -> heat (BS,P,Hd,Wd), locs (BS,P,2), scos (BS,P)."""
    BS, C, H, W = frames.shape
    d = DOWNSAMPLE
    Hd, Wd = H // d, W // d
    K = d * W * C
    N = POINTS * Wd
    Npad = ((N + _LANES - 1) // _LANES) * _LANES   # lane-dense output width

    # NHWC layout so every (frame, output-row) slab is contiguous; the reshape
    # below is then free.  (glue)
    x_rows = jnp.transpose(frames, (0, 2, 3, 1)).reshape(BS * Hd, K)

    # Fused avg-pool + 1x1-conv operator, shape (d*W*C, P*Wd), zero-padded to
    # Npad lanes.  Replaces the O((H*W)^2) dense pool matrix.  (glue)
    sel = (jnp.arange(W)[:, None] // d == jnp.arange(Wd)[None, :]).astype(jnp.float32)
    A = w.T[None, :, :, None] * sel[:, None, None, :]                 # (W, C, P, Wd)
    A = jnp.broadcast_to(A[None], (d, W, C, POINTS, Wd)) / float(d * d)
    A = A.reshape(K, N)
    bias_row = jnp.broadcast_to(b.reshape(POINTS, 1), (POINTS, Wd)).reshape(1, N)
    if Npad != N:
        A = jnp.pad(A, ((0, 0), (0, Npad - N)))
        bias_row = jnp.pad(bias_row, ((0, 0), (0, Npad - N)))

    F = _frames_per_step(BS, Hd, K, Npad)
    Mblk = F * Hd
    heat_rows = pl.pallas_call(
        _detector_kernel,
        grid=(BS // F,),
        in_specs=[
            pl.BlockSpec((Mblk, K), lambda i: (i, 0)),
            pl.BlockSpec((K, Npad), lambda i: (0, 0)),
            pl.BlockSpec((1, Npad), lambda i: (0, 0)),
        ],
        out_specs=pl.BlockSpec((Mblk, Npad), lambda i: (i, 0)),
        out_shape=jax.ShapeDtypeStruct((BS * Hd, Npad), jnp.float32),
        compiler_params=pltpu.CompilerParams(
            dimension_semantics=("parallel",)),
    )(x_rows, A, bias_row)

    # rows are (frame, hd), cols are (p, wd)  ->  (BS, P, Hd, Wd)
    heat = heat_rows[:, :N].reshape(BS, Hd, POINTS, Wd).transpose(0, 2, 1, 3)

    # TODO(synk): soft-argmax / peak-score head kept in plain XLA (tiny
    # reduction over Hd*Wd) instead of lane-sparse in-kernel stores.
    flat = heat.reshape(BS, POINTS, Hd * Wd)
    m = jnp.max(flat, axis=-1, keepdims=True)
    e = jnp.exp((flat - m) * TAU)
    probs = e / jnp.sum(e, axis=-1, keepdims=True)
    xs = (jnp.arange(Hd * Wd) % Wd).astype(jnp.float32)
    ys = (jnp.arange(Hd * Wd) // Wd).astype(jnp.float32)
    lx = jnp.sum(probs * xs, axis=-1)
    ly = jnp.sum(probs * ys, axis=-1)
    locs = (jnp.stack([lx, ly], axis=-1) + 0.5) * d - 0.5             # input-pixel coords
    scos = m[..., 0]
    return heat, locs, scos


# ----------------------------------------------------------------------------
# Lucas-Kanade forward / forward-backward / backward tracking kernel
# ----------------------------------------------------------------------------
def _make_lk_kernel(C, H, W, P, nwin, steps, sub, lanes):
    half = (nwin - 1) / 2.0
    fW = float(W - 1)
    fH = float(H - 1)
    inv_C = 1.0 / float(C)

    def _gray(frame):
        # (C, H, W) -> (H, W): grayscale fused in-kernel (C is the slow axis,
        # so this is C-1 vreg adds on the VPU).
        return jnp.sum(frame, axis=0) * inv_C

    def _stack3(I):
        # [I | dI/dx | dI/dy] stacked along the lane axis -> (H, 3W) so the
        # template + gradient sampling later is ONE matmul instead of three.
        zc = jnp.zeros((H, 1), jnp.float32)
        zr = jnp.zeros((1, W), jnp.float32)
        Ix = jnp.concatenate([zc, (I[:, 2:] - I[:, :-2]) * 0.5, zc], axis=1)
        Iy = jnp.concatenate([zr, (I[2:, :] - I[:-2, :]) * 0.5, zr], axis=0)
        return jnp.concatenate([I, Ix, Iy], axis=1)

    def kernel(f0_ref, f1_ref, l0_ref, l1_ref, out_ref, carry_ref):
        t = pl.program_id(1)

        # Constant iota operands hoisted once per grid step (JAX does not CSE
        # broadcast_in_dim; building them inside the Newton loop repeats them).
        offs = lax.broadcasted_iota(jnp.float32, (1, nwin), 1) - half      # (1,nwin)
        gridH = lax.broadcasted_iota(jnp.float32, (1, 1, H), 2)            # (1,1,H)
        gridW = lax.broadcasted_iota(jnp.float32, (1, 1, W), 2)            # (1,1,W)

        def _interp(c, grid):
            # c: (npts,1) centers -> (npts, nwin, n) bilinear tent weights.
            centers = c + offs                                             # (npts,nwin)
            return jnp.maximum(0.0, 1.0 - jnp.abs(grid - centers[:, :, None]))

        def _lane_contract(tm, Rx):
            # (npts,nwin,W) x (npts,nwin,W) -> (npts,nwin,nwin) via VPU mul +
            # lane reduction (no degenerate per-point batched einsum).
            return jnp.sum(tm[:, :, None, :] * Rx[:, None, :, :], axis=-1)

        def _ssum(a):                                                      # (npts,n,n)->(npts,1)
            return jnp.sum(jnp.sum(a, axis=2), axis=1, keepdims=True)

        def _track(src_stack, I_dst, x0, y0, npts):
            # Ry/Rx built once and shared by template + gradients (stacked source).
            Ry = _interp(y0, gridH)                                        # (npts,nwin,H)
            Rx = _interp(x0, gridW)                                        # (npts,nwin,W)
            tmp = jnp.dot(Ry.reshape(npts * nwin, H), src_stack,
                          preferred_element_type=jnp.float32).reshape(npts, nwin, 3 * W)
            T = _lane_contract(tmp[:, :, 0 * W:1 * W], Rx)
            Gx = _lane_contract(tmp[:, :, 1 * W:2 * W], Rx)
            Gy = _lane_contract(tmp[:, :, 2 * W:3 * W], Rx)
            Axx = _ssum(Gx * Gx) + EPS
            Axy = _ssum(Gx * Gy)
            Ayy = _ssum(Gy * Gy) + EPS
            inv_det = pl.reciprocal(Axx * Ayy - Axy * Axy, approx=True)    # EUP slot
            gx, gy = x0, y0
            for _ in range(steps):                 # static unroll, steps is small
                Ryg = _interp(gy, gridH)
                Rxg = _interp(gx, gridW)
                J = _lane_contract(
                    jnp.dot(Ryg.reshape(npts * nwin, H), I_dst,
                            preferred_element_type=jnp.float32).reshape(npts, nwin, W),
                    Rxg)
                err = T - J
                bx = _ssum(Gx * err)
                by = _ssum(Gy * err)
                gx = jnp.clip(gx + (Ayy * bx - Axy * by) * inv_det, 0.0, fW)
                gy = jnp.clip(gy + (Axx * by - Axy * bx) * inv_det, 0.0, fH)
            return gx, gy                                                  # (npts,1) each

        # Frame carry: the stacked [I|Ix|Iy] of frame t stays in VMEM from the
        # previous grid step, so each frame is DMA'd, grayscaled and
        # differentiated exactly once.
        @pl.when(t == 0)
        def _():
            carry_ref[...] = _stack3(_gray(f0_ref[0, 0]))

        src0 = carry_ref[...]                                              # frame t   (H,3W)
        I1 = _gray(f1_ref[0, 0])                                           # frame t+1 (H,W)
        src1 = _stack3(I1)
        I0 = src0[:, 0:W]

        l0 = l0_ref[0, 0]                                                  # (P,2)
        l1 = l1_ref[0, 0]

        # forward: t -> t+1
        nx, ny = _track(src0, I1, l0[:, 0:1], l0[:, 1:2], P)
        # forward-backward (seeded with the tracked points) and backward
        # (seeded with detections at t+1) share source/destination frames, so
        # they run as a single batched 2P-point track.
        sx = jnp.concatenate([nx, l1[:, 0:1]], axis=0)
        sy = jnp.concatenate([ny, l1[:, 1:2]], axis=0)
        gx, gy = _track(src1, I0, sx, sy, 2 * P)

        carry_ref[...] = src1                                              # becomes frame t at t+1

        # Lane-dense packed output tile: rows = points, cols = [nx,ny,fx,fy,bx,by].
        coords = jnp.concatenate(
            [nx, ny, gx[:P], gy[:P], gx[P:], gy[P:]], axis=1)              # (P,6)
        padded = jnp.concatenate(
            [coords, jnp.zeros((P, lanes - 6), jnp.float32)], axis=1)
        if sub > P:
            padded = jnp.concatenate(
                [padded, jnp.zeros((sub - P, lanes), jnp.float32)], axis=0)
        out_ref[0, 0] = padded

    return kernel


def lk_forward_backward(inputs, locs):
    """inputs: (B,S,C,H,W), locs: (B,S,P,2) -> 3 x (B, S-1, P, 2)."""
    B, S, C, H, W = inputs.shape
    P = locs.shape[2]
    sub = 8 * ((P + 7) // 8)
    lanes = _LANES

    kernel = _make_lk_kernel(C, H, W, P, WINDOW, STEPS, sub, lanes)
    packed = pl.pallas_call(
        kernel,
        grid=(B, S - 1),
        in_specs=[
            pl.BlockSpec((1, 1, C, H, W), lambda b, t: (b, 0, 0, 0, 0)),      # frame 0 (t==0)
            pl.BlockSpec((1, 1, C, H, W), lambda b, t: (b, t + 1, 0, 0, 0)),  # frame t+1
            pl.BlockSpec((1, 1, P, 2), lambda b, t: (b, t, 0, 0)),            # detections at t
            pl.BlockSpec((1, 1, P, 2), lambda b, t: (b, t + 1, 0, 0)),        # detections at t+1
        ],
        out_specs=pl.BlockSpec((1, 1, sub, lanes), lambda b, t: (b, t, 0, 0)),
        out_shape=jax.ShapeDtypeStruct((B, S - 1, sub, lanes), jnp.float32),
        scratch_shapes=[pltpu.VMEM((H, 3 * W), jnp.float32)],
        compiler_params=pltpu.CompilerParams(
            dimension_semantics=("parallel", "arbitrary")),
    )(inputs, inputs, locs, locs)

    coords = packed[:, :, :P, :6]                                     # (B, S-1, P, 6)
    batch_next = coords[..., 0:2]
    batch_fback = coords[..., 2:4]
    batch_back = coords[..., 4:6]
    return batch_next, batch_fback, batch_back


# ----------------------------------------------------------------------------
# LK.forward equivalent
# ----------------------------------------------------------------------------
def lk_module_forward(inputs, w, b):
    assert inputs.ndim == 5, "This model accepts 5 dimension input tensor"
    B, S, C, H, W = inputs.shape
    gathered = inputs.reshape(B * S, C, H, W)
    heat, locs, scos = detector_forward(gathered, w, b)

    Hd, Wd = H // DOWNSAMPLE, W // DOWNSAMPLE
    heatmaps = [heat.reshape(B, S, POINTS, Hd, Wd)]                   # single-stage detector
    batch_locs = locs.reshape(B, S, POINTS, 2)
    batch_scos = scos.reshape(B, S, POINTS)

    # grayscale conversion is fused inside the LK kernel (raw frames passed).
    batch_next, batch_fback, batch_back = lk_forward_backward(inputs, batch_locs)
    return heatmaps, batch_locs, batch_scos, batch_next, batch_fback, batch_back


if __name__ == "__main__":
    key = jax.random.PRNGKey(0)
    k1, k2, k3 = jax.random.split(key, 3)
    B, S, C, H, W = 2, 4, 3, 16, 16
    inputs = jax.random.normal(k1, (B, S, C, H, W), jnp.float32)
    # deterministic synthetic detector parameters (P x C 1x1-conv weight + bias)
    w = jax.random.normal(k2, (POINTS, C), jnp.float32) * 0.5
    b = jax.random.normal(k3, (POINTS, 1), jnp.float32) * 0.1

    outs = lk_module_forward(inputs, w, b)
    jax.block_until_ready(outs)

    heatmaps, batch_locs, batch_scos, batch_next, batch_fback, batch_back = outs
    assert heatmaps[0].shape == (B, S, POINTS, H // DOWNSAMPLE, W // DOWNSAMPLE)
    assert batch_locs.shape == (B, S, POINTS, 2)
    assert batch_scos.shape == (B, S, POINTS)
    assert batch_next.shape == (B, S - 1, POINTS, 2)
    assert batch_fback.shape == (B, S - 1, POINTS, 2)
    assert batch_back.shape == (B, S - 1, POINTS, 2)
    print("KERNEL_OK")
</pallas_src>

<mosaic_0001>
module attributes {stable_mosaic.version = 11 : i64} {
  func.func @_detector_kernel(%arg0: i32, %arg1: memref<32x192xf32, #tpu.memory_space<vmem>>, %arg2: memref<192x128xf32, #tpu.memory_space<vmem>>, %arg3: memref<1x128xf32, #tpu.memory_space<vmem>>, %arg4: memref<32x128xf32, #tpu.memory_space<vmem>>) attributes {dimension_semantics = [#tpu.dimension_semantics<parallel>], iteration_bounds = array<i64: 1>, scalar_prefetch = 0 : i64, scratch_operands = 0 : i64, tpu.core_type = #tpu.core_type<tc>, window_params = [{transform_indices = @transform_0, window_bounds = array<i64: 32, 192>}, {pipeline_mode = #tpu.pipeline_mode<synchronous>, transform_indices = @transform_1, window_bounds = array<i64: 192, 128>}, {pipeline_mode = #tpu.pipeline_mode<synchronous>, transform_indices = @transform_2, window_bounds = array<i64: 1, 128>}, {transform_indices = @transform_3, window_bounds = array<i64: 32, 128>}]} {
    %c0 = arith.constant 0 : index
    %c0_0 = arith.constant 0 : index
    %0 = vector.load %arg1[%c0, %c0_0] : memref<32x192xf32, #tpu.memory_space<vmem>>, vector<32x192xf32>
    %c0_1 = arith.constant 0 : index
    %c0_2 = arith.constant 0 : index
    %1 = vector.load %arg2[%c0_1, %c0_2] : memref<192x128xf32, #tpu.memory_space<vmem>>, vector<192x128xf32>
    %cst = arith.constant dense<0.000000e+00> : vector<32x128xf32>
    %2 = tpu.matmul %0, %1, %cst {dimension_numbers = #tpu.dot_dimension_numbers<[1], [0], [0], [1], [0, 0, 1, 1], [], []>} : vector<32x192xf32>, vector<192x128xf32>, vector<32x128xf32> -> vector<32x128xf32>
    %c0_3 = arith.constant 0 : index
    %c0_4 = arith.constant 0 : index
    %3 = vector.load %arg3[%c0_3, %c0_4] : memref<1x128xf32, #tpu.memory_space<vmem>>, vector<1x128xf32>
    %4 = vector.broadcast %3 : vector<1x128xf32> to vector<32x128xf32>
    %5 = arith.addf %2, %4 : vector<32x128xf32>
    %c0_5 = arith.constant 0 : index
    %c0_6 = arith.constant 0 : index
    %6 = vector.load %arg4[%c0_5, %c0_6] : memref<32x128xf32, #tpu.memory_space<vmem>>, vector<32x128xf32>
    tpu.vector_store %arg4[%c0_5, %c0_6], %5 {strides = array<i32>} : memref<32x128xf32, #tpu.memory_space<vmem>>, vector<32x128xf32>,
    return
  }
  func.func @transform_0(%arg0: i32) -> (i32, i32) {
    %c0_i32 = arith.constant 0 : i32
    %c0_i32_0 = arith.constant 0 : i32
    return %arg0, %c0_i32 : i32, i32
  }
  func.func @transform_1(%arg0: i32) -> (i32, i32) {
    %c0_i32 = arith.constant 0 : i32
    %c0_i32_0 = arith.constant 0 : i32
    %c0_i32_1 = arith.constant 0 : i32
    return %c0_i32, %c0_i32_0 : i32, i32
  }
  func.func @transform_2(%arg0: i32) -> (i32, i32) {
    %c0_i32 = arith.constant 0 : i32
    %c0_i32_0 = arith.constant 0 : i32
    %c0_i32_1 = arith.constant 0 : i32
    return %c0_i32, %c0_i32_0 : i32, i32
  }
  func.func @transform_3(%arg0: i32) -> (i32, i32) {
    %c0_i32 = arith.constant 0 : i32
    %c0_i32_0 = arith.constant 0 : i32
    return %arg0, %c0_i32 : i32, i32
  }
}

</mosaic_0001>

<llo_original>
// kernel: tpu_custom_call.1
$region0: #{tpu_custom_call.1}
  #allocation0 [shape = 'u32[]', space=smem, size = 0x4, offset = 0x4, fixed_abs, tag = 'smem constant byte address 0x4 - core index']
  #allocation1 [shape = 'u32[72,128]{1,0:T(1,128)}', space=vmem, size = 0x9000, scoped, tag = 'internal scratch']
  %s0 = inlined_call_operand.hbm [shape: f32[32,192], index: 0, kind: input, shape index: {}]
  %s1 = inlined_call_operand.hbm [shape: f32[192,128], index: 1, kind: input, shape index: {}]
  %s2 = inlined_call_operand.vmem [shape: f32[1,128], index: 2, kind: input, shape index: {}]
  %s3 = inlined_call_operand.hbm [shape: f32[32,128], index: 3, kind: output, shape index: {}]
  %s4 = sld [smem:[#allocation0]]
  $region30: #{tpu_custom_call.1} parent=0
    _
  %s6 = ssub.s32 1, %s4
  %s7 = scalar_select 0, %s6, %s4
  $region1: #{tpu_custom_call.1} parent=0
    #allocation2 [shape = 'u8[32768]{0}', space=vmem, size = 0x8000, scoped, tag = 'input window, operand 0, single buffered']
    #allocation3 [shape = 's32[1]{0}', space=sflag, size = 0x4, scoped, tag = 'scoped memory for tpu_custom_call.1']
    #allocation4 [shape = 's32[1]{0}', space=sflag, size = 0x4, scoped, tag = 'scoped memory for tpu_custom_call.1']
    #allocation5 [shape = 'u8[98304]{0}', space=vmem, size = 0x18000, scoped, tag = 'input window, operand 1, single buffered']
    #allocation6 [shape = 's32[1]{0}', space=sflag, size = 0x4, scoped, tag = 'scoped memory for tpu_custom_call.1']
    #allocation7 [shape = 'u8[16384]{0}', space=vmem, size = 0x4000, scoped, tag = 'output window, operand 0, single buffered']
    %8 = vsyncpa [#allocation3], 0
    %9 = vsyncpa [#allocation6], 0
    %10 = vsyncpa [#allocation4], 0
    // Predicated region
    $region2: #{tpu_custom_call.1} parent=1 // pred_check
      _
    $region3: #{tpu_custom_call.1} parent=1 // pred_check_branch
      %12 = sbr.rel (0) target = $region5
    $region4: #{tpu_custom_call.1} parent=1 // pred_region
      %14 = vsyncadd [#allocation3], 0
      %s15 = sshll.u32 %s0, 4
      %s16 = int_to_ptr.hbm [resolvable:$true] %s15
      %s17 = sshll.u32 [#allocation2], 4
      %s18 = int_to_ptr.vmem [resolvable:$true] %s17
      %23 = dma.hbm_to_vmem [thread:$0]  %s16, 1024, %s18, [#allocation3], 256, 256, 16
    $region5: #{tpu_custom_call.1} parent=1 // pred_fallthru
      _
    // Predicated region
    $region6: #{tpu_custom_call.1} parent=1 // pred_check
      _
    $region7: #{tpu_custom_call.1} parent=1 // pred_check_branch
      %25 = sbr.rel (0) target = $region9
    $region8: #{tpu_custom_call.1} parent=1 // pred_region
      %27 = vsyncadd [#allocation6], 0
      %s28 = sshll.u32 %s1, 4
      %s29 = int_to_ptr.hbm [resolvable:$true] %s28
      %s30 = sshll.u32 [#allocation5], 4
      %s31 = int_to_ptr.vmem [resolvable:$true] %s30
      %36 = dma.hbm_to_vmem [thread:$0]  %s29, 3072, %s31, [#allocation6], 128, 128, 8
    $region9: #{tpu_custom_call.1} parent=1 // pred_fallthru
      _
    // Predicated region
    $region10: #{tpu_custom_call.1} parent=1 // pred_check
      _
    $region11: #{tpu_custom_call.1} parent=1 // pred_check_branch
      %38 = sbr.rel (0) target = $region13
    $region12: #{tpu_custom_call.1} parent=1 // pred_region
      _
    $region13: #{tpu_custom_call.1} parent=1 // pred_fallthru
      _
    // Predicated region
    $region14: #{tpu_custom_call.1} parent=1 // pred_check
      _
    $region15: #{tpu_custom_call.1} parent=1 // pred_check_branch
      %40 = sbr.rel (0) target = $region17
    $region16: #{tpu_custom_call.1} parent=1 // pred_region
      %42 = dma.done [#allocation3], 1024
    $region17: #{tpu_custom_call.1} parent=1 // pred_fallthru
      _
    // Predicated region
    $region18: #{tpu_custom_call.1} parent=1 // pred_check
      _
    $region19: #{tpu_custom_call.1} parent=1 // pred_check_branch
      %44 = sbr.rel (0) target = $region21
    $region20: #{tpu_custom_call.1} parent=1 // pred_region
      %46 = dma.done [#allocation6], 3072
    $region21: #{tpu_custom_call.1} parent=1 // pred_fallthru
      _
    %v47 = vld [vmem:[#allocation2] sm:$0xff]
    %v48 = vld [vmem:[#allocation2 + $0x8] sm:$0xff]
    %v49 = vld [vmem:[#allocation2 + $0x10] sm:$0xff]
    %v50 = vld [vmem:[#allocation2 + $0x18] sm:$0xff]
    %v51 = vld [vmem:[#allocation2 + $0x20] sm:$0xff]
    %v52 = vld [vmem:[#allocation2 + $0x28] sm:$0xff]
    %v53 = vld [vmem:[#allocation2 + $0x30] sm:$0xff]
    %v54 = vld [vmem:[#allocation2 + $0x38] sm:$0xff]
    %v55 = vld [vmem:[#allocation5] sm:$0xff]
    %v56 = vld [vmem:[#allocation5 + $0x8] sm:$0xff]
    %v57 = vld [vmem:[#allocation5 + $0x10] sm:$0xff]
    %v58 = vld [vmem:[#allocation5 + $0x18] sm:$0xff]
    %v59 = vld [vmem:[#allocation5 + $0x20] sm:$0xff]
    %v60 = vld [vmem:[#allocation5 + $0x28] sm:$0xff]
    %v61 = vld [vmem:[#allocation5 + $0x30] sm:$0xff]
    %v62 = vld [vmem:[#allocation5 + $0x38] sm:$0xff]
    %v63 = vld [vmem:[#allocation5 + $0x40] sm:$0xff]
    %v64 = vld [vmem:[#allocation5 + $0x48] sm:$0xff]
    %v65 = vld [vmem:[#allocation5 + $0x50] sm:$0xff]
    %v66 = vld [vmem:[#allocation5 + $0x58] sm:$0xff]
    %v67 = vld [vmem:[#allocation5 + $0x60] sm:$0xff]
    %v68 = vld [vmem:[#allocation5 + $0x68] sm:$0xff]
    %v69 = vld [vmem:[#allocation5 + $0x70] sm:$0xff]
    %v70 = vld [vmem:[#allocation5 + $0x78] sm:$0xff]
    %v71 = vld [vmem:[#allocation5 + $0x80] sm:$0xff]
    %v72 = vld [vmem:[#allocation5 + $0x88] sm:$0xff]
    %v73 = vld [vmem:[#allocation5 + $0x90] sm:$0xff]
    %v74 = vld [vmem:[#allocation5 + $0x98] sm:$0xff]
    %v75 = vld [vmem:[#allocation5 + $0xa0] sm:$0xff]
    %v76 = vld [vmem:[#allocation5 + $0xa8] sm:$0xff]
    %v77 = vld [vmem:[#allocation5 + $0xb0] sm:$0xff]
    %v78 = vld [vmem:[#allocation5 + $0xb8] sm:$0xff]
    %v79 = vld [vmem:[%s2] sm:$0x1]
    %v81 = vperm.slane %v79, 0
    %vm83 = vcmask 523264
    %v85 = vsel %vm83, %v48, 0
    %v88 = vsel %vm83, %v50, 0
    %v91 = vsel %vm83, %v52, 0
    %v94 = vsel %vm83, %v54, 0
    %96 = vmatpush.msra.mxu0 %v70
    %97 = vmatpush.msra.mxu0 %v69
    %98 = vmatpush.msra.mxu0 %v68
    %99 = vmatpush.msra.mxu0 %v67
    %100 = vmatpush.msra.mxu0 %v66
    %101 = vmatpush.msra.mxu0 %v65
    %102 = vmatpush.msra.mxu0 %v64
    %103 = vmatpush.msra.mxu0 %v63
    %104 = vmatpush.msra.mxu0 %v62
    %105 = vmatpush.msra.mxu0 %v61
    %106 = vmatpush.msra.mxu0 %v60
    %107 = vmatpush.msra.mxu0 %v59
    %108 = vmatpush.msra.mxu0 %v58
    %109 = vmatpush.msra.mxu0 %v57
    %110 = vmatpush.msra.mxu0 %v56
    %111 = vmatpush.msra.mxu0 %v55
    %112 = vmatmul.f32.gmra.mxu0 %v47
    %v113 = vpop.f32.mrf.mxu0
    %v114 = vadd.f32 %v81, %v113
    %115 = vmatmul.f32.gmra.mxu0 %v49
    %v116 = vpop.f32.mrf.mxu0
    %v117 = vadd.f32 %v81, %v116
    %118 = vmatmul.f32.gmra.mxu0 %v51
    %v119 = vpop.f32.mrf.mxu0
    %v120 = vadd.f32 %v81, %v119
    %121 = vmatmul.f32.gmra.mxu0 %v53
    %v122 = vpop.f32.mrf.mxu0
    %v123 = vadd.f32 %v81, %v122
    %124 = vdwg.mxu0
    %125 = vmatpush.msra.mxu0 0.0
    %126 = vmatpush.msra.mxu0 0.0
    %127 = vmatpush.msra.mxu0 0.0
    %128 = vmatpush.msra.mxu0 0.0
    %129 = vmatpush.msra.mxu0 0.0
    %130 = vmatpush.msra.mxu0 0.0
    %131 = vmatpush.msra.mxu0 0.0
    %132 = vmatpush.msra.mxu0 0.0
    %133 = vmatpush.msra.mxu0 %v78
    %134 = vmatpush.msra.mxu0 %v77
    %135 = vmatpush.msra.mxu0 %v76
    %136 = vmatpush.msra.mxu0 %v75
    %137 = vmatpush.msra.mxu0 %v74
    %138 = vmatpush.msra.mxu0 %v73
    %139 = vmatpush.msra.mxu0 %v72
    %140 = vmatpush.msra.mxu0 %v71
    %141 = vmatmul.f32.gmra.mxu0 %v85
    %v142 = vpop.f32.mrf.mxu0
    %v143 = vadd.f32 %v114, %v142
    %144 = vmatmul.f32.gmra.mxu0 %v88
    %v145 = vpop.f32.mrf.mxu0
    %v146 = vadd.f32 %v117, %v145
    %147 = vmatmul.f32.gmra.mxu0 %v91
    %v148 = vpop.f32.mrf.mxu0
    %v149 = vadd.f32 %v120, %v148
    %150 = vmatmul.f32.gmra.mxu0 %v94
    %v151 = vpop.f32.mrf.mxu0
    %v152 = vadd.f32 %v123, %v151
    %153 = vdwg.mxu0
    %154 = vst [vmem:[#allocation7] sm:$0xff] %v143
    %155 = vst [vmem:[#allocation7 + $0x8] sm:$0xff] %v146
    %156 = vst [vmem:[#allocation7 + $0x10] sm:$0xff] %v149
    %157 = vst [vmem:[#allocation7 + $0x18] sm:$0xff] %v152
    // Predicated region
    $region22: #{tpu_custom_call.1} parent=1 // pred_check
      _
    $region23: #{tpu_custom_call.1} parent=1 // pred_check_branch
      %159 = sbr.rel (0) target = $region25
    $region24: #{tpu_custom_call.1} parent=1 // pred_region
      %161 = vsyncadd [#allocation4], 0
      %s162 = sshll.u32 [#allocation7], 4
      %s163 = int_to_ptr.vmem [resolvable:$true] %s162
      %s164 = sshll.u32 %s3, 4
      %s165 = int_to_ptr.hbm [resolvable:$true] %s164
      %170 = dma.vmem_to_hbm [thread:$0]  %s163, 512, %s165, [#allocation4], 128, 128, 8
    $region25: #{tpu_custom_call.1} parent=1 // pred_fallthru
      _
    // Predicated region
    $region26: #{tpu_custom_call.1} parent=1 // pred_check
      _
    $region27: #{tpu_custom_call.1} parent=1 // pred_check_branch
      %172 = sbr.rel (0) target = $region29
    $region28: #{tpu_custom_call.1} parent=1 // pred_region
      %174 = dma.done [#allocation4], 512
    $region29: #{tpu_custom_call.1} parent=1 // pred_fallthru
      _
    %175 = vsyncpa [#allocation3], 1
    %176 = vsyncpa [#allocation6], 1
    %177 = vsyncpa [#allocation4], 1

</llo_original>
